<compile_context>
chip_gen: v5e
topology: v5e:2x2
jax: 0.10.0
libtpu: 0.0.40
codegen_flags: <defaults>
</compile_context>

<pallas_src>
import functools

import jax
import jax.numpy as jnp
from jax.experimental import pallas as pl
from jax.experimental.pallas import tpu as pltpu

TEMPERATURE = 2.0
INV_TEMPERATURE = 1.0 / TEMPERATURE
LOSS_SCALE = 0.1 * 0.5  # loss = 0.1 * (0.5 * js)
_F32_TINY = float(jnp.finfo(jnp.float32).tiny)
_MIB = 1024 * 1024


def _round_up(x, m):
    return ((x + m - 1) // m) * m


def _tpu_vmem_capacity_bytes(default_bytes=64 * _MIB):
    """Physical VMEM per TensorCore; conservative (v7x-sized) fallback."""
    try:
        cap = int(pltpu.get_tpu_info().vmem_capacity_bytes)
        if cap > 0:
            return cap
    except Exception:  # older jax / non-TPU tracing: stay conservative
        pass
    return default_bytes


def _jskl_kernel(ys_ref, yt_ref, out_ref, *, batch_size, block_rows, trans_dtype):
    """One (block_rows, C) tile: fused JS-KL partial sum -> lane-dense (1,8,128) tile."""
    f32 = jnp.float32
    exact_trans = jnp.dtype(trans_dtype) == jnp.dtype(jnp.float32)

    # HBM transfer dtype may be bf16; all accumulation stays f32.
    ys = ys_ref[...].astype(f32) * INV_TEMPERATURE
    yt = yt_ref[...].astype(f32) * INV_TEMPERATURE

    def softmax_lastdim(x):
        x_max = jnp.max(x, axis=-1, keepdims=True)               # XLU lane reduce
        z = x - x_max
        if exact_trans:
            e = jnp.exp(z)                                        # EUP, f32
        else:
            e = jnp.exp(z.astype(trans_dtype)).astype(f32)        # EUP, bf16 (v6e/v7x)
        denom = jnp.sum(e, axis=-1, keepdims=True)                # XLU lane reduce
        return e * pl.reciprocal(denom, approx=False)             # exact: 2 per row

    p_s = softmax_lastdim(ys)
    p_t = softmax_lastdim(yt)
    m = 0.5 * (p_s + p_t)

    # kl_s + kl_t = 2 * sum(m * (log m - m))  (exact: p_s + p_t = 2 m).
    # xlogy(0) = 0 preserved via max(m, tiny): m == 0 -> 0 * finite = 0.
    m_safe = jnp.maximum(m, _F32_TINY)
    if exact_trans:
        log_m = jnp.log(m_safe)
    else:
        log_m = jnp.log(m_safe.astype(trans_dtype)).astype(f32)
    term = m * (log_m - m)

    row_sum = jnp.sum(term, axis=-1, keepdims=True)               # (rows, 1), f32

    # Mask rows past the true batch size (partial last block reads padding); the
    # select keeps any garbage-row NaN/Inf from reaching the sum.
    if batch_size % block_rows != 0:
        row_ids = (pl.program_id(0) * block_rows
                   + jax.lax.broadcasted_iota(jnp.int32, (block_rows, 1), 0))
        row_sum = jnp.where(row_ids < batch_size, row_sum, 0.0)

    block_total = jnp.sum(row_sum)
    # Lane-dense, (8,128)-aligned store: broadcast the block total over one full tile.
    out_ref[...] = jnp.full(out_ref.shape, block_total, dtype=f32)


def jskl_loss(y_s, y_t, *, transfer_dtype=None, transcendental_dtype=None,
              block_rows=None, vmem_limit_bytes=None):
    """Pallas JSKL forward (classification mode). y_s, y_t: (B, C) logits -> scalar f32.

    transfer_dtype: optional HBM transfer dtype for the inputs.  Default None keeps
      the inputs bit-exact (recommended unless the cast provably fuses upstream or
      the logits are already bf16).
    transcendental_dtype: dtype for exp/log.  Default None -> float32 everywhere.
      jnp.bfloat16 roughly doubles EUP throughput on v6e/v7x (do not use on v5e).
    """
    assert y_s.shape == y_t.shape and y_s.ndim == 2
    B, C = y_s.shape

    if transfer_dtype is not None and y_s.dtype != jnp.dtype(transfer_dtype):
        y_s = y_s.astype(transfer_dtype)
        y_t = y_t.astype(transfer_dtype)
    if transcendental_dtype is None:
        transcendental_dtype = jnp.float32

    itemsize = jnp.dtype(y_s.dtype).itemsize
    row_align = 8 if itemsize >= 4 else (16 if itemsize == 2 else 32)

    # --- VMEM budgeting, derived from the actual chip ------------------------------
    vmem_cap = _tpu_vmem_capacity_bytes()           # 128 MiB v5e/v6e, 64 MiB v7x
    if vmem_limit_bytes is None:
        vmem_limit_bytes = max(32 * _MIB, min(3 * vmem_cap // 4, vmem_cap - 16 * _MIB))
    # Per-step bytes ~= 2 inputs x 2 (double-buffer) x rows x C x itemsize
    #                 + ~6 f32 tile-sized intermediate live ranges.
    budget = max(8 * _MIB, vmem_limit_bytes // 4)   # ~24 MiB on v5e/v6e, ~12 MiB on v7x
    per_row_bytes = C * (4 * itemsize + 6 * 4)

    if block_rows is None:
        block_rows = max(row_align, min(2048, budget // max(per_row_bytes, 1)))
        block_rows = min(block_rows, _round_up(B, row_align))
        # Keep >= 2 grid steps when possible so v7x megacore can split the batch.
        if B > row_align:
            block_rows = min(block_rows, _round_up(pl.cdiv(B, 2), row_align))
    else:
        block_rows = min(block_rows, _round_up(B, row_align))
    block_rows = max(row_align, (block_rows // row_align) * row_align)

    est_step_bytes = block_rows * per_row_bytes + 2 * 8 * 128 * 4
    if est_step_bytes > vmem_limit_bytes:
        # TODO(synk): tile the class axis (two-pass / online softmax) for vocab-scale C.
        raise NotImplementedError(
            f"JSKL kernel keeps the whole class axis per block; estimated per-step "
            f"VMEM {est_step_bytes} B exceeds the limit {vmem_limit_bytes} B (C={C}).")

    num_blocks = pl.cdiv(B, block_rows)

    kernel = functools.partial(
        _jskl_kernel, batch_size=B, block_rows=block_rows,
        trans_dtype=jnp.dtype(transcendental_dtype))

    cost = pl.CostEstimate(
        flops=int(12 * B * C),
        transcendentals=int(3 * B * C),
        bytes_accessed=int(2 * B * C * itemsize + num_blocks * 8 * 128 * 4),
    )

    partials = pl.pallas_call(
        kernel,
        out_shape=jax.ShapeDtypeStruct((num_blocks, 8, 128), jnp.float32),
        grid_spec=pltpu.PrefetchScalarGridSpec(
            num_scalar_prefetch=0,
            grid=(num_blocks,),
            in_specs=[
                pl.BlockSpec((block_rows, C), lambda i: (i, 0)),
                pl.BlockSpec((block_rows, C), lambda i: (i, 0)),
            ],
            out_specs=pl.BlockSpec((1, 8, 128), lambda i: (i, 0, 0)),
        ),
        compiler_params=pltpu.CompilerParams(
            # Grid steps are fully independent -> v7x's two TensorCores split them.
            dimension_semantics=("parallel",),
            vmem_limit_bytes=int(vmem_limit_bytes),
        ),
        cost_estimate=cost,
    )(y_s, y_t)

    # Tiny final reduction + scaling in XLA: loss = 0.05/B * sum(m*(log m - m)).
    return (LOSS_SCALE / B) * jnp.sum(partials[:, 0, 0])


def jskl_ref(y_s, y_t):
    """Pure-JAX reference mirroring the PyTorch module (classification mode)."""
    t = TEMPERATURE
    p_s = jax.nn.softmax(y_s / t, axis=-1)
    p_t = jax.nn.softmax(y_t / t, axis=-1)
    m = 0.5 * (p_s + p_t)
    b = y_s.shape[0]
    log_m = jnp.log(jnp.maximum(m, _F32_TINY))

    def kl(p):  # F.kl_div(input=p, target=m, reduction='batchmean'), xlogy(0)=0 rule
        return jnp.sum(jnp.where(m > 0, m * (log_m - p), 0.0)) / b

    js = 0.5 * (kl(p_s) + kl(p_t))
    return 0.1 * (0.5 * js)


if __name__ == "__main__":
    key = jax.random.PRNGKey(0)
    k1, k2 = jax.random.split(key)

    # Case 1: single block, bit-exact f32 path (the default).
    B, C = 8, 32
    y_s = jax.random.normal(k1, (B, C), dtype=jnp.float32)
    y_t = jax.random.normal(k2, (B, C), dtype=jnp.float32)
    loss = jskl_loss(y_s, y_t)
    jax.block_until_ready(loss)
    ref = jskl_ref(y_s, y_t)
    assert jnp.allclose(loss, ref, rtol=2e-4, atol=1e-6), (loss, ref)

    # Case 2: multi-block path with a partial (masked) last block.
    B2, C2 = 20, 128
    y_s2 = jax.random.normal(jax.random.PRNGKey(1), (B2, C2), dtype=jnp.float32)
    y_t2 = jax.random.normal(jax.random.PRNGKey(2), (B2, C2), dtype=jnp.float32)
    loss2 = jskl_loss(y_s2, y_t2, block_rows=8)
    jax.block_until_ready(loss2)
    ref2 = jskl_ref(y_s2, y_t2)
    assert jnp.allclose(loss2, ref2, rtol=2e-4, atol=1e-6), (loss2, ref2)

    # Case 3: opt-in bf16 HBM transfer (compute still f32 in-kernel); compare against
    # the reference evaluated on the same bf16-rounded logits.
    B3, C3 = 16, 256
    y_s3 = jax.random.normal(jax.random.PRNGKey(3), (B3, C3), dtype=jnp.float32)
    y_t3 = jax.random.normal(jax.random.PRNGKey(4), (B3, C3), dtype=jnp.float32)
    loss3 = jskl_loss(y_s3, y_t3, transfer_dtype=jnp.bfloat16)
    jax.block_until_ready(loss3)
    ref3 = jskl_ref(y_s3.astype(jnp.bfloat16).astype(jnp.float32),
                    y_t3.astype(jnp.bfloat16).astype(jnp.float32))
    assert jnp.allclose(loss3, ref3, rtol=1e-3, atol=1e-6), (loss3, ref3)

    print("KERNEL_OK")
</pallas_src>

<mosaic_0001>
module attributes {stable_mosaic.version = 11 : i64} {
  func.func @_jskl_kernel(%arg0: i32, %arg1: memref<8x32xf32, #tpu.memory_space<vmem>>, %arg2: memref<8x32xf32, #tpu.memory_space<vmem>>, %arg3: memref<1x8x128xf32, #tpu.memory_space<vmem>>) attributes {dimension_semantics = [#tpu.dimension_semantics<parallel>], iteration_bounds = array<i64: 1>, scalar_prefetch = 0 : i64, scratch_operands = 0 : i64, tpu.core_type = #tpu.core_type<tc>, window_params = [{transform_indices = @transform_0, window_bounds = array<i64: 8, 32>}, {transform_indices = @transform_1, window_bounds = array<i64: 8, 32>}, {transform_indices = @transform_2, window_bounds = array<i64: 1, 8, 128>}]} {
    %c0 = arith.constant 0 : index
    %c0_0 = arith.constant 0 : index
    %0 = vector.load %arg1[%c0, %c0_0] : memref<8x32xf32, #tpu.memory_space<vmem>>, vector<8x32xf32>
    %cst = arith.constant 5.000000e-01 : f32
    %1 = vector.broadcast %cst : f32 to vector<8x32xf32>
    %2 = arith.mulf %0, %1 : vector<8x32xf32>
    %c0_1 = arith.constant 0 : index
    %c0_2 = arith.constant 0 : index
    %3 = vector.load %arg2[%c0_1, %c0_2] : memref<8x32xf32, #tpu.memory_space<vmem>>, vector<8x32xf32>
    %cst_3 = arith.constant 5.000000e-01 : f32
    %4 = vector.broadcast %cst_3 : f32 to vector<8x32xf32>
    %5 = arith.mulf %3, %4 : vector<8x32xf32>
    %cst_4 = arith.constant dense<0xFF800000> : vector<8xf32>
    %6 = vector.multi_reduction <maximumf>, %2, %cst_4 [1] : vector<8x32xf32> to vector<8xf32>
    %7 = vector.shape_cast %6 : vector<8xf32> to vector<8x1xf32>
    %8 = vector.broadcast %7 : vector<8x1xf32> to vector<8x32xf32>
    %9 = arith.subf %2, %8 : vector<8x32xf32>
    %10 = math.exp %9 : vector<8x32xf32>
    %cst_5 = arith.constant dense<0.000000e+00> : vector<8xf32>
    %11 = vector.multi_reduction <add>, %10, %cst_5 [1] : vector<8x32xf32> to vector<8xf32>
    %12 = vector.shape_cast %11 : vector<8xf32> to vector<8x1xf32>
    %13 = tpu.reciprocal %12 : vector<8x1xf32> -> vector<8x1xf32>
    %14 = vector.broadcast %13 : vector<8x1xf32> to vector<8x32xf32>
    %15 = arith.mulf %10, %14 : vector<8x32xf32>
    %cst_6 = arith.constant dense<0xFF800000> : vector<8xf32>
    %16 = vector.multi_reduction <maximumf>, %5, %cst_6 [1] : vector<8x32xf32> to vector<8xf32>
    %17 = vector.shape_cast %16 : vector<8xf32> to vector<8x1xf32>
    %18 = vector.broadcast %17 : vector<8x1xf32> to vector<8x32xf32>
    %19 = arith.subf %5, %18 : vector<8x32xf32>
    %20 = math.exp %19 : vector<8x32xf32>
    %cst_7 = arith.constant dense<0.000000e+00> : vector<8xf32>
    %21 = vector.multi_reduction <add>, %20, %cst_7 [1] : vector<8x32xf32> to vector<8xf32>
    %22 = vector.shape_cast %21 : vector<8xf32> to vector<8x1xf32>
    %23 = tpu.reciprocal %22 : vector<8x1xf32> -> vector<8x1xf32>
    %24 = vector.broadcast %23 : vector<8x1xf32> to vector<8x32xf32>
    %25 = arith.mulf %20, %24 : vector<8x32xf32>
    %26 = arith.addf %15, %25 : vector<8x32xf32>
    %cst_8 = arith.constant 5.000000e-01 : f32
    %27 = vector.broadcast %cst_8 : f32 to vector<8x32xf32>
    %28 = arith.mulf %27, %26 : vector<8x32xf32>
    %cst_9 = arith.constant 1.17549435E-38 : f32
    %29 = vector.broadcast %cst_9 : f32 to vector<8x32xf32>
    %30 = arith.maximumf %28, %29 : vector<8x32xf32>
    %31 = math.log %30 : vector<8x32xf32>
    %32 = arith.subf %31, %28 : vector<8x32xf32>
    %33 = arith.mulf %28, %32 : vector<8x32xf32>
    %cst_10 = arith.constant dense<0.000000e+00> : vector<8xf32>
    %34 = vector.multi_reduction <add>, %33, %cst_10 [1] : vector<8x32xf32> to vector<8xf32>
    %35 = vector.shape_cast %34 : vector<8xf32> to vector<8x1xf32>
    %36 = vector.shape_cast %35 : vector<8x1xf32> to vector<1x8x1xf32>
    %cst_11 = arith.constant dense<0.000000e+00> : vector<1xf32>
    %37 = vector.multi_reduction <add>, %36, %cst_11 [1, 2] : vector<1x8x1xf32> to vector<1xf32>
    %38 = vector.shape_cast %37 : vector<1xf32> to vector<1x1x1xf32>
    %39 = vector.extract %38[0, 0, 0] : f32 from vector<1x1x1xf32>
    %40 = vector.broadcast %39 : f32 to vector<1x8x128xf32>
    %c0_12 = arith.constant 0 : index
    %c0_13 = arith.constant 0 : index
    %c0_14 = arith.constant 0 : index
    %41 = vector.load %arg3[%c0_12, %c0_13, %c0_14] : memref<1x8x128xf32, #tpu.memory_space<vmem>>, vector<1x8x128xf32>
    tpu.vector_store %arg3[%c0_12, %c0_13, %c0_14], %40 {strides = array<i32>} : memref<1x8x128xf32, #tpu.memory_space<vmem>>, vector<1x8x128xf32>,
    return
  }
  func.func @transform_0(%arg0: i32) -> (i32, i32) {
    %c0_i32 = arith.constant 0 : i32
    %c0_i32_0 = arith.constant 0 : i32
    return %arg0, %c0_i32 : i32, i32
  }
  func.func @transform_1(%arg0: i32) -> (i32, i32) {
    %c0_i32 = arith.constant 0 : i32
    %c0_i32_0 = arith.constant 0 : i32
    return %arg0, %c0_i32 : i32, i32
  }
  func.func @transform_2(%arg0: i32) -> (i32, i32, i32) {
    %c0_i32 = arith.constant 0 : i32
    %c0_i32_0 = arith.constant 0 : i32
    %c0_i32_1 = arith.constant 0 : i32
    return %arg0, %c0_i32, %c0_i32_0 : i32, i32, i32
  }
}

</mosaic_0001>

<llo_original>
// kernel: tpu_custom_call.1
$region0: #{tpu_custom_call.1}
  #allocation0 [shape = 'u32[]', space=smem, size = 0x4, offset = 0x4, fixed_abs, tag = 'smem constant byte address 0x4 - core index']
  #allocation1 [shape = 'u32[72,128]{1,0:T(1,128)}', space=vmem, size = 0x9000, scoped, tag = 'internal scratch']
  %s0 = inlined_call_operand.hbm [shape: f32[8,32], index: 0, kind: input, shape index: {}]
  %s1 = inlined_call_operand.hbm [shape: f32[8,32], index: 1, kind: input, shape index: {}]
  %s2 = inlined_call_operand.hbm [shape: f32[1,8,128], index: 2, kind: output, shape index: {}]
  %s3 = sld [smem:[#allocation0]]
  $region26: #{tpu_custom_call.1} parent=0
    _
  %s5 = ssub.s32 1, %s3
  %s6 = scalar_select 0, %s5, %s3
  $region1: #{tpu_custom_call.1} parent=0
    #allocation2 [shape = 'u8[4096]{0}', space=vmem, size = 0x1000, scoped, tag = 'input window, operand 0, single buffered']
    #allocation3 [shape = 's32[1]{0}', space=sflag, size = 0x4, scoped, tag = 'scoped memory for tpu_custom_call.1']
    #allocation4 [shape = 's32[1]{0}', space=sflag, size = 0x4, scoped, tag = 'scoped memory for tpu_custom_call.1']
    #allocation5 [shape = 'u8[4096]{0}', space=vmem, size = 0x1000, scoped, tag = 'input window, operand 1, single buffered']
    #allocation6 [shape = 's32[1]{0}', space=sflag, size = 0x4, scoped, tag = 'scoped memory for tpu_custom_call.1']
    #allocation7 [shape = 'u8[4096]{0}', space=vmem, size = 0x1000, scoped, tag = 'output window, operand 0, single buffered']
    %7 = vsyncpa [#allocation3], 0
    %8 = vsyncpa [#allocation6], 0
    %9 = vsyncpa [#allocation4], 0
    // Predicated region
    $region2: #{tpu_custom_call.1} parent=1 // pred_check
      _
    $region3: #{tpu_custom_call.1} parent=1 // pred_check_branch
      %11 = sbr.rel (0) target = $region5
    $region4: #{tpu_custom_call.1} parent=1 // pred_region
      %13 = vsyncadd [#allocation3], 0
      %s15 = sshll.u32 %s0, 4
      %s16 = int_to_ptr.hbm [resolvable:$true] %s15
      %s17 = sshll.u32 [#allocation2], 4
      %s18 = int_to_ptr.vmem [resolvable:$true] %s17
      %20 = dma.hbm_to_vmem [thread:$0]  %s16, 128, %s18, [#allocation3]
    $region5: #{tpu_custom_call.1} parent=1 // pred_fallthru
      _
    // Predicated region
    $region6: #{tpu_custom_call.1} parent=1 // pred_check
      _
    $region7: #{tpu_custom_call.1} parent=1 // pred_check_branch
      %22 = sbr.rel (0) target = $region9
    $region8: #{tpu_custom_call.1} parent=1 // pred_region
      %24 = vsyncadd [#allocation6], 0
      %s26 = sshll.u32 %s1, 4
      %s27 = int_to_ptr.hbm [resolvable:$true] %s26
      %s28 = sshll.u32 [#allocation5], 4
      %s29 = int_to_ptr.vmem [resolvable:$true] %s28
      %31 = dma.hbm_to_vmem [thread:$0]  %s27, 128, %s29, [#allocation6]
    $region9: #{tpu_custom_call.1} parent=1 // pred_fallthru
      _
    // Predicated region
    $region10: #{tpu_custom_call.1} parent=1 // pred_check
      _
    $region11: #{tpu_custom_call.1} parent=1 // pred_check_branch
      %33 = sbr.rel (0) target = $region13
    $region12: #{tpu_custom_call.1} parent=1 // pred_region
      %35 = dma.done [#allocation3], 128
    $region13: #{tpu_custom_call.1} parent=1 // pred_fallthru
      _
    // Predicated region
    $region14: #{tpu_custom_call.1} parent=1 // pred_check
      _
    $region15: #{tpu_custom_call.1} parent=1 // pred_check_branch
      %37 = sbr.rel (0) target = $region17
    $region16: #{tpu_custom_call.1} parent=1 // pred_region
      %39 = dma.done [#allocation6], 128
    $region17: #{tpu_custom_call.1} parent=1 // pred_fallthru
      _
    %v40 = vld [vmem:[#allocation2] sm:$0xff]
    %v41 = vmul.f32 %v40, 0.5
    %v42 = vld [vmem:[#allocation5] sm:$0xff]
    %v43 = vmul.f32 %v42, 0.5
    %vm44 = vcmask 261120
    %v45 = vsel %vm44, %v41, -inf
    %46 = vmax.xlane.f32.xlu0 %v45
    %v47 = vpop.xlane.xlu0 %46
    %v48 = vsub.f32 %v41, %v47
    %v49 = vmul.f32 %v48, 1.442695
    %v50 = vpow.pop %v49
    %v51 = vsel %vm44, %v50, 0.0
    %52 = vadd.xlane.f32.xlu0 %v51
    %v53 = vpop.xlane.xlu0 %52
    %v54 = vrcp.pop %v53
    %v55 = vmul.f32 %v53, %v54
    %v56 = vsub.f32 1.0, %v55
    %v57 = vmul.f32 %v54, %v56
    %v58 = vadd.f32 %v54, %v57
    %vm59 = vweird.f32 %v53
    %vm60 = vweird.f32 %v54
    %vm61 = vmor %vm59, %vm60
    %v62 = vsel %vm61, %v54, %v58
    %v63 = vand.u32 2147483647, %v53
    %vm64 = vcmp.eq.f32.partialorder %v63, 8.507059e+37
    %v65 = vand.u32 %v53, 2147483648
    %v66 = vor.u32 1.1754944e-38, %v65
    %v67 = vsel %vm64, %v66, %v62
    %v68 = vmul.f32 %v50, %v67
    %v69 = vsel %vm44, %v43, -inf
    %70 = vmax.xlane.f32.xlu0 %v69
    %v71 = vpop.xlane.xlu0 %70
    %v72 = vsub.f32 %v43, %v71
    %v73 = vmul.f32 %v72, 1.442695
    %v74 = vpow.pop %v73
    %v75 = vsel %vm44, %v74, 0.0
    %76 = vadd.xlane.f32.xlu0 %v75
    %v77 = vpop.xlane.xlu0 %76
    %v78 = vrcp.pop %v77
    %v79 = vmul.f32 %v77, %v78
    %v80 = vsub.f32 1.0, %v79
    %v81 = vmul.f32 %v78, %v80
    %v82 = vadd.f32 %v78, %v81
    %vm83 = vweird.f32 %v77
    %vm84 = vweird.f32 %v78
    %vm85 = vmor %vm83, %vm84
    %v86 = vsel %vm85, %v78, %v82
    %v87 = vand.u32 2147483647, %v77
    %vm88 = vcmp.eq.f32.partialorder %v87, 8.507059e+37
    %v89 = vand.u32 %v77, 2147483648
    %v90 = vor.u32 1.1754944e-38, %v89
    %v91 = vsel %vm88, %v90, %v86
    %v92 = vmul.f32 %v74, %v91
    %v93 = vadd.f32 %v68, %v92
    %v94 = vmul.f32 %v93, 0.5
    %v95 = vmax.f32 %v94, 1.1754944e-38
    %v96 = vlog2.pop %v95
    %v97 = vmul.f32 %v96, 0.6931472
    %v98 = vsub.f32 %v97, %v94
    %v99 = vmul.f32 %v94, %v98
    %v100 = vsel %vm44, %v99, 0.0
    %101 = vadd.xlane.f32.xlu0 %v100
    %v102 = vpop.xlane.xlu0 %101
    %vm103 = vcmask 7168
    %v104 = vsel %vm103, %v102, 0.0
    %105 = vadd.xlane.f32.xlu0 %v104
    %v106 = vpop.xlane.xlu0 %105
    %v107 = vrot.slane %v106, 4
    %v108 = vadd.f32 %v106, %v107
    %v109 = vrot.slane %v108, 2
    %v110 = vadd.f32 %v108, %v109
    %v111 = vrot.slane %v110, 1
    %v112 = vadd.f32 %v110, %v111
    %s113 = vtos %v112
    %v114 = vstv %s113
    %115 = vst [vmem:[#allocation7] sm:$0xff] %v114
    // Predicated region
    $region18: #{tpu_custom_call.1} parent=1 // pred_check
      _
    $region19: #{tpu_custom_call.1} parent=1 // pred_check_branch
      %117 = sbr.rel (0) target = $region21
    $region20: #{tpu_custom_call.1} parent=1 // pred_region
      %119 = vsyncadd [#allocation4], 0
      %s121 = sshll.u32 [#allocation7], 4
      %s122 = int_to_ptr.vmem [resolvable:$true] %s121
      %s123 = sshll.u32 %s2, 4
      %s124 = int_to_ptr.hbm [resolvable:$true] %s123
      %126 = dma.vmem_to_hbm [thread:$0]  %s122, 128, %s124, [#allocation4]
    $region21: #{tpu_custom_call.1} parent=1 // pred_fallthru
      _
    // Predicated region
    $region22: #{tpu_custom_call.1} parent=1 // pred_check
      _
    $region23: #{tpu_custom_call.1} parent=1 // pred_check_branch
      %128 = sbr.rel (0) target = $region25
    $region24: #{tpu_custom_call.1} parent=1 // pred_region
      %130 = dma.done [#allocation4], 128
    $region25: #{tpu_custom_call.1} parent=1 // pred_fallthru
      _
    %131 = vsyncpa [#allocation3], 1
    %132 = vsyncpa [#allocation6], 1
    %133 = vsyncpa [#allocation4], 1

</llo_original>
